<compile_context>
chip_gen: v7x
topology: tpu7x:2x2x1
jax: 0.10.0
libtpu: 0.0.40
codegen_flags: <defaults>
</compile_context>

<pallas_src>
import functools

import jax
import jax.numpy as jnp
from jax.experimental import pallas as pl
from jax.experimental.pallas import tpu as pltpu


def _round_up(x, m):
    return (x + m - 1) // m * m


def _lane_pack(out_dim):
    """How many batch rows to fold per kernel row so stores are 128-lane dense."""
    if out_dim < 128 and 128 % out_dim == 0:
        return 128 // out_dim
    return 1


def _decoder_kernel(z_ref, w0_ref, b0_ref, w1_ref, b1_ref, w2_ref, b2_ref,
                    out_ref):
    """One batch tile of the fused 3-layer MLP (ReLU, ReLU, none) + Sigmoid.

    MXU operands are bf16 with f32 accumulation; bias add / ReLU / sigmoid are
    computed in f32 on the VPU/EUP.
    """
    x = z_ref[...].astype(jnp.bfloat16)

    # Linear 0 + ReLU
    h = jnp.dot(x, w0_ref[...], preferred_element_type=jnp.float32)
    h = jnp.maximum(h + b0_ref[...], 0.0)

    # Linear 1 + ReLU
    h = jnp.dot(h.astype(jnp.bfloat16), w1_ref[...],
                preferred_element_type=jnp.float32)
    h = jnp.maximum(h + b1_ref[...], 0.0)

    # Linear 2 (no activation) + Sigmoid
    h = jnp.dot(h.astype(jnp.bfloat16), w2_ref[...],
                preferred_element_type=jnp.float32)
    out_ref[...] = jax.nn.sigmoid(h + b2_ref[...])


def prepare_decoder_params(params, n_dof, time_steps):
    """One-time param packing: block-diagonal (x pack) bf16 weights, f32 biases."""
    pack = _lane_pack(n_dof * time_steps)
    w0, b0, w1, b1, w2, b2 = params

    def pack_w(w):
        if pack > 1:
            w = jnp.kron(jnp.eye(pack, dtype=w.dtype), w)  # blockdiag(w,...,w)
        return w.astype(jnp.bfloat16)

    def pack_b(b):
        if pack > 1:
            b = jnp.tile(b, (1, pack))
        return b.astype(jnp.float32)

    return (pack_w(w0), pack_b(b0), pack_w(w1), pack_b(b1),
            pack_w(w2), pack_b(b2))


def decoder_forward(z, y, packed_params, *, n_dof, time_steps, tile_b=512):
    """z: (B, nhid*n_dof) f32, y: (B, ncond) f32 or None
       -> (B, n_dof, time_steps) f32."""
    w0, b0, w1, b1, w2, b2 = packed_params
    if y is not None:
        z = jnp.concatenate([z, y], axis=1)          # torch.cat((z, y), dim=1)

    batch, in_dim = z.shape
    out_dim = n_dof * time_steps
    pack = _lane_pack(out_dim)

    # Fold `pack` batch rows into one kernel row (row-major => free reshape).
    pad_rows = (-batch) % pack
    if pad_rows:
        z = jnp.pad(z, ((0, pad_rows), (0, 0)))
    rows = (batch + pad_rows) // pack
    z_packed = z.reshape(rows, in_dim * pack)
    out_cols = out_dim * pack

    # Batch tile (in packed rows): large to amortize per-step overhead and
    # keep the MXU M-dim at 256; clamped + sublane-aligned for tiny batches.
    tile_r = max(8, min(tile_b // pack, _round_up(rows, 8)))
    grid = (pl.cdiv(rows, tile_r),)

    resident = lambda a: pl.BlockSpec(a.shape, lambda i: (0, 0))

    out = pl.pallas_call(
        _decoder_kernel,
        out_shape=jax.ShapeDtypeStruct((rows, out_cols), jnp.float32),
        grid=grid,
        in_specs=[
            pl.BlockSpec((tile_r, in_dim * pack), lambda i: (i, 0)),
            resident(w0), resident(b0),
            resident(w1), resident(b1),
            resident(w2), resident(b2),
        ],
        out_specs=pl.BlockSpec((tile_r, out_cols), lambda i: (i, 0)),
        compiler_params=pltpu.CompilerParams(
            dimension_semantics=("parallel",)),
    )(z_packed, w0, b0, w1, b1, w2, b2)

    # Unpack rows (free reshape), drop padded rows, then match .view(-1, c, w).
    out = out.reshape(rows * pack, out_dim)
    if pad_rows:
        out = out[:batch]
    return out.reshape(batch, n_dof, time_steps)


def init_decoder_params(key, n_dof, time_steps, nhid=8, ncond=4):
    """Deterministic synthetic parameters (shapes match the PyTorch module).

    Weights are stored as (in_dim, out_dim), i.e. transposed vs nn.Linear."""
    in_dim = nhid * n_dof + ncond
    dims = [in_dim, 64, 128, time_steps * n_dof]
    params = []
    for i in range(3):
        key, kw, kb = jax.random.split(key, 3)
        bound = 1.0 / jnp.sqrt(dims[i])
        w = jax.random.uniform(kw, (dims[i], dims[i + 1]), jnp.float32,
                               -bound, bound)
        b = jax.random.uniform(kb, (1, dims[i + 1]), jnp.float32,
                               -bound, bound)
        params += [w, b]
    return tuple(params)


def decoder_reference(zc, params):
    """Plain-JAX reference mirroring the kernel numerics (bf16 MXU, f32 acc)."""
    w0, b0, w1, b1, w2, b2 = params

    def layer(x, w, b):
        return jnp.dot(x.astype(jnp.bfloat16), w.astype(jnp.bfloat16),
                       preferred_element_type=jnp.float32) + b

    h = jnp.maximum(layer(zc, w0, b0), 0.0)
    h = jnp.maximum(layer(h, w1, b1), 0.0)
    return jax.nn.sigmoid(layer(h, w2, b2))


if __name__ == "__main__":
    # Small shapes consistent with the module: shape=(n_dof, time_steps)
    n_dof, time_steps = 4, 16
    nhid, ncond, nclass = 8, 4, 6
    batch = 2

    key = jax.random.PRNGKey(0)
    key, kz, kemb = jax.random.split(key, 3)
    params = init_decoder_params(key, n_dof, time_steps, nhid, ncond)
    packed = prepare_decoder_params(params, n_dof, time_steps)

    # CVAE conditioning: label -> embedding (plain JAX), then cat onto z.
    emb_table = jax.random.normal(kemb, (nclass, ncond), jnp.float32)
    labels = jnp.array([1, 3], dtype=jnp.int32)
    y = emb_table[labels]

    z = jax.random.normal(kz, (batch, nhid * n_dof), jnp.float32)

    fwd = jax.jit(functools.partial(decoder_forward,
                                    n_dof=n_dof, time_steps=time_steps))
    out = jax.block_until_ready(fwd(z, y, packed))

    assert out.shape == (batch, n_dof, time_steps), out.shape

    zc = jnp.concatenate([z, y], axis=1)
    ref = decoder_reference(zc, params).reshape(-1, n_dof, time_steps)
    err = float(jnp.max(jnp.abs(out - ref)))
    assert jnp.allclose(out, ref, atol=2e-3, rtol=2e-3), f"mismatch: {err}"

    print("KERNEL_OK")
</pallas_src>

<mosaic_0001>
module attributes {stable_mosaic.version = 11 : i64} {
  func.func @_decoder_kernel(%arg0: i32, %arg1: memref<8x72xf32, #tpu.memory_space<vmem>>, %arg2: memref<72x128xbf16, #tpu.memory_space<vmem>>, %arg3: memref<1x128xf32, #tpu.memory_space<vmem>>, %arg4: memref<128x256xbf16, #tpu.memory_space<vmem>>, %arg5: memref<1x256xf32, #tpu.memory_space<vmem>>, %arg6: memref<256x128xbf16, #tpu.memory_space<vmem>>, %arg7: memref<1x128xf32, #tpu.memory_space<vmem>>, %arg8: memref<8x128xf32, #tpu.memory_space<vmem>>) attributes {dimension_semantics = [#tpu.dimension_semantics<parallel>], iteration_bounds = array<i64: 1>, scalar_prefetch = 0 : i64, scratch_operands = 0 : i64, tpu.core_type = #tpu.core_type<tc>, window_params = [{transform_indices = @transform_0, window_bounds = array<i64: 8, 72>}, {pipeline_mode = #tpu.pipeline_mode<synchronous>, transform_indices = @transform_1, window_bounds = array<i64: 72, 128>}, {pipeline_mode = #tpu.pipeline_mode<synchronous>, transform_indices = @transform_2, window_bounds = array<i64: 1, 128>}, {pipeline_mode = #tpu.pipeline_mode<synchronous>, transform_indices = @transform_3, window_bounds = array<i64: 128, 256>}, {pipeline_mode = #tpu.pipeline_mode<synchronous>, transform_indices = @transform_4, window_bounds = array<i64: 1, 256>}, {pipeline_mode = #tpu.pipeline_mode<synchronous>, transform_indices = @transform_5, window_bounds = array<i64: 256, 128>}, {pipeline_mode = #tpu.pipeline_mode<synchronous>, transform_indices = @transform_6, window_bounds = array<i64: 1, 128>}, {transform_indices = @transform_7, window_bounds = array<i64: 8, 128>}]} {
    %c0 = arith.constant 0 : index
    %c0_0 = arith.constant 0 : index
    %0 = vector.load %arg1[%c0, %c0_0] : memref<8x72xf32, #tpu.memory_space<vmem>>, vector<8x72xf32>
    %1 = arith.truncf %0 : vector<8x72xf32> to vector<8x72xbf16>
    %c0_1 = arith.constant 0 : index
    %c0_2 = arith.constant 0 : index
    %2 = vector.load %arg2[%c0_1, %c0_2] : memref<72x128xbf16, #tpu.memory_space<vmem>>, vector<72x128xbf16>
    %cst = arith.constant dense<0.000000e+00> : vector<8x128xf32>
    %3 = tpu.matmul %1, %2, %cst {dimension_numbers = #tpu.dot_dimension_numbers<[1], [0], [0], [1], [0, 0, 1, 1], [], []>} : vector<8x72xbf16>, vector<72x128xbf16>, vector<8x128xf32> -> vector<8x128xf32>
    %c0_3 = arith.constant 0 : index
    %c0_4 = arith.constant 0 : index
    %4 = vector.load %arg3[%c0_3, %c0_4] : memref<1x128xf32, #tpu.memory_space<vmem>>, vector<1x128xf32>
    %5 = vector.broadcast %4 : vector<1x128xf32> to vector<8x128xf32>
    %6 = arith.addf %3, %5 : vector<8x128xf32>
    %cst_5 = arith.constant 0.000000e+00 : f32
    %7 = vector.broadcast %cst_5 : f32 to vector<8x128xf32>
    %8 = arith.maximumf %6, %7 : vector<8x128xf32>
    %9 = arith.truncf %8 : vector<8x128xf32> to vector<8x128xbf16>
    %c0_6 = arith.constant 0 : index
    %c0_7 = arith.constant 0 : index
    %10 = vector.load %arg4[%c0_6, %c0_7] : memref<128x256xbf16, #tpu.memory_space<vmem>>, vector<128x256xbf16>
    %cst_8 = arith.constant dense<0.000000e+00> : vector<8x256xf32>
    %11 = tpu.matmul %9, %10, %cst_8 {dimension_numbers = #tpu.dot_dimension_numbers<[1], [0], [0], [1], [0, 0, 1, 1], [], []>} : vector<8x128xbf16>, vector<128x256xbf16>, vector<8x256xf32> -> vector<8x256xf32>
    %c0_9 = arith.constant 0 : index
    %c0_10 = arith.constant 0 : index
    %12 = vector.load %arg5[%c0_9, %c0_10] : memref<1x256xf32, #tpu.memory_space<vmem>>, vector<1x256xf32>
    %13 = vector.broadcast %12 : vector<1x256xf32> to vector<8x256xf32>
    %14 = arith.addf %11, %13 : vector<8x256xf32>
    %cst_11 = arith.constant 0.000000e+00 : f32
    %15 = vector.broadcast %cst_11 : f32 to vector<8x256xf32>
    %16 = arith.maximumf %14, %15 : vector<8x256xf32>
    %17 = arith.truncf %16 : vector<8x256xf32> to vector<8x256xbf16>
    %c0_12 = arith.constant 0 : index
    %c0_13 = arith.constant 0 : index
    %18 = vector.load %arg6[%c0_12, %c0_13] : memref<256x128xbf16, #tpu.memory_space<vmem>>, vector<256x128xbf16>
    %cst_14 = arith.constant dense<0.000000e+00> : vector<8x128xf32>
    %19 = tpu.matmul %17, %18, %cst_14 {dimension_numbers = #tpu.dot_dimension_numbers<[1], [0], [0], [1], [0, 0, 1, 1], [], []>} : vector<8x256xbf16>, vector<256x128xbf16>, vector<8x128xf32> -> vector<8x128xf32>
    %c0_15 = arith.constant 0 : index
    %c0_16 = arith.constant 0 : index
    %20 = vector.load %arg7[%c0_15, %c0_16] : memref<1x128xf32, #tpu.memory_space<vmem>>, vector<1x128xf32>
    %21 = vector.broadcast %20 : vector<1x128xf32> to vector<8x128xf32>
    %22 = arith.addf %19, %21 : vector<8x128xf32>
    %23 = arith.negf %22 : vector<8x128xf32>
    %24 = math.exp %23 : vector<8x128xf32>
    %cst_17 = arith.constant 1.000000e+00 : f32
    %25 = vector.broadcast %cst_17 : f32 to vector<8x128xf32>
    %26 = arith.addf %25, %24 : vector<8x128xf32>
    %27 = arith.divf %25, %26 : vector<8x128xf32>
    %c0_18 = arith.constant 0 : index
    %c0_19 = arith.constant 0 : index
    %28 = vector.load %arg8[%c0_18, %c0_19] : memref<8x128xf32, #tpu.memory_space<vmem>>, vector<8x128xf32>
    tpu.vector_store %arg8[%c0_18, %c0_19], %27 {strides = array<i32>} : memref<8x128xf32, #tpu.memory_space<vmem>>, vector<8x128xf32>,
    return
  }
  func.func @transform_0(%arg0: i32) -> (i32, i32) {
    %c0_i32 = arith.constant 0 : i32
    %c0_i32_0 = arith.constant 0 : i32
    return %arg0, %c0_i32 : i32, i32
  }
  func.func @transform_1(%arg0: i32) -> (i32, i32) {
    %c0_i32 = arith.constant 0 : i32
    %c0_i32_0 = arith.constant 0 : i32
    %c0_i32_1 = arith.constant 0 : i32
    return %c0_i32, %c0_i32_0 : i32, i32
  }
  func.func @transform_2(%arg0: i32) -> (i32, i32) {
    %c0_i32 = arith.constant 0 : i32
    %c0_i32_0 = arith.constant 0 : i32
    %c0_i32_1 = arith.constant 0 : i32
    return %c0_i32, %c0_i32_0 : i32, i32
  }
  func.func @transform_3(%arg0: i32) -> (i32, i32) {
    %c0_i32 = arith.constant 0 : i32
    %c0_i32_0 = arith.constant 0 : i32
    %c0_i32_1 = arith.constant 0 : i32
    return %c0_i32, %c0_i32_0 : i32, i32
  }
  func.func @transform_4(%arg0: i32) -> (i32, i32) {
    %c0_i32 = arith.constant 0 : i32
    %c0_i32_0 = arith.constant 0 : i32
    %c0_i32_1 = arith.constant 0 : i32
    return %c0_i32, %c0_i32_0 : i32, i32
  }
  func.func @transform_5(%arg0: i32) -> (i32, i32) {
    %c0_i32 = arith.constant 0 : i32
    %c0_i32_0 = arith.constant 0 : i32
    %c0_i32_1 = arith.constant 0 : i32
    return %c0_i32, %c0_i32_0 : i32, i32
  }
  func.func @transform_6(%arg0: i32) -> (i32, i32) {
    %c0_i32 = arith.constant 0 : i32
    %c0_i32_0 = arith.constant 0 : i32
    %c0_i32_1 = arith.constant 0 : i32
    return %c0_i32, %c0_i32_0 : i32, i32
  }
  func.func @transform_7(%arg0: i32) -> (i32, i32) {
    %c0_i32 = arith.constant 0 : i32
    %c0_i32_0 = arith.constant 0 : i32
    return %arg0, %c0_i32 : i32, i32
  }
}

</mosaic_0001>

<llo_original>
// kernel: decoder_forward.1
$region0: #{decoder_forward.1}
  #allocation0 [shape = 'u32[]', space=smem, size = 0x4, offset = 0x4, fixed_abs, tag = 'smem constant byte address 0x4 - core index']
  #allocation1 [shape = 'u32[144,128]{1,0:T(1,128)}', space=vmem, size = 0x12000, scoped, tag = 'internal scratch']
  %s0 = inlined_call_operand.vmem [shape: f32[1,72], index: 0, kind: input, shape index: {}]
  %s1 = inlined_call_operand.hbm [shape: bf16[72,128], index: 1, kind: input, shape index: {}]
  %s2 = inlined_call_operand.vmem [shape: f32[1,128], index: 2, kind: input, shape index: {}]
  %s3 = inlined_call_operand.hbm [shape: bf16[128,256], index: 3, kind: input, shape index: {}]
  %s4 = inlined_call_operand.vmem [shape: f32[1,256], index: 4, kind: input, shape index: {}]
  %s5 = inlined_call_operand.hbm [shape: bf16[256,128], index: 5, kind: input, shape index: {}]
  %s6 = inlined_call_operand.vmem [shape: f32[1,128], index: 6, kind: input, shape index: {}]
  %s7 = inlined_call_operand.vmem [shape: f32[1,128], index: 7, kind: output, shape index: {}]
  %s8 = sld [smem:[#allocation0]]
  $region80: #{decoder_forward.1} parent=0
    _
  %s10 = ssub.s32 1, %s8
  %s11 = scalar_select 0, %s10, %s8
  $region1: #{decoder_forward.1} parent=0
    #allocation2 [shape = 'u8[18432]{0}', space=vmem, size = 0x4800, scoped, tag = 'input window, operand 1, single buffered']
    #allocation3 [shape = 's32[1]{0}', space=sflag, size = 0x4, scoped, tag = 'scoped memory for decoder_forward.1']
    #allocation4 [shape = 'u8[65536]{0}', space=vmem, size = 0x10000, scoped, tag = 'input window, operand 3, single buffered']
    #allocation5 [shape = 's32[1]{0}', space=sflag, size = 0x4, scoped, tag = 'scoped memory for decoder_forward.1']
    #allocation6 [shape = 'u8[65536]{0}', space=vmem, size = 0x10000, scoped, tag = 'input window, operand 5, single buffered']
    #allocation7 [shape = 'u8[4096]{0}', space=vmem, size = 0x1000, scoped, tag = 'output window, operand 0, single buffered']
    %12 = vsyncpa [#allocation3], 0
    %13 = vsyncpa [#allocation5], 0
    // Predicated region
    $region2: #{decoder_forward.1} parent=1 // pred_check
      _
    $region3: #{decoder_forward.1} parent=1 // pred_check_branch
      %15 = sbr.rel (0) target = $region5
    $region4: #{decoder_forward.1} parent=1 // pred_region
      _
    $region5: #{decoder_forward.1} parent=1 // pred_fallthru
      _
    // Predicated region
    $region6: #{decoder_forward.1} parent=1 // pred_check
      _
    $region7: #{decoder_forward.1} parent=1 // pred_check_branch
      %17 = sbr.rel (0) target = $region9
    $region8: #{decoder_forward.1} parent=1 // pred_region
      %s19 = ssub.s32 576, 576
      %20 = vsyncadd [#allocation3], %s19
      %s21 = sshll.u32 [#allocation2], 4
      %s22 = int_to_ptr.vmem [resolvable:$true] %s21
      %27 = dma.hbm_to_vmem [thread:$0]  %s1, 576, %s22, [#allocation3], 64, 64, 4
    $region9: #{decoder_forward.1} parent=1 // pred_fallthru
      _
    // Predicated region
    $region10: #{decoder_forward.1} parent=1 // pred_check
      _
    $region11: #{decoder_forward.1} parent=1 // pred_check_branch
      %29 = sbr.rel (0) target = $region13
    $region12: #{decoder_forward.1} parent=1 // pred_region
      _
    $region13: #{decoder_forward.1} parent=1 // pred_fallthru
      _
    // Predicated region
    $region14: #{decoder_forward.1} parent=1 // pred_check
      _
    $region15: #{decoder_forward.1} parent=1 // pred_check_branch
      %31 = sbr.rel (0) target = $region17
    $region16: #{decoder_forward.1} parent=1 // pred_region
      %s33 = ssub.s32 2048, 2048
      %34 = vsyncadd [#allocation5], %s33
      %s35 = sshll.u32 [#allocation4], 4
      %s36 = int_to_ptr.vmem [resolvable:$true] %s35
      %41 = dma.hbm_to_vmem [thread:$0]  %s3, 2048, %s36, [#allocation5], 128, 128, 8
    $region17: #{decoder_forward.1} parent=1 // pred_fallthru
      _
    // Predicated region
    $region18: #{decoder_forward.1} parent=1 // pred_check
      _
    $region19: #{decoder_forward.1} parent=1 // pred_check_branch
      %43 = sbr.rel (0) target = $region21
    $region20: #{decoder_forward.1} parent=1 // pred_region
      _
    $region21: #{decoder_forward.1} parent=1 // pred_fallthru
      _
    // Predicated region
    $region22: #{decoder_forward.1} parent=1 // pred_check
      _
    $region23: #{decoder_forward.1} parent=1 // pred_check_branch
      %45 = sbr.rel (0) target = $region25
    $region24: #{decoder_forward.1} parent=1 // pred_region
      %s47 = ssub.s32 2048, 2048
      %48 = vsyncadd [#allocation5], %s47
      %s49 = sshll.u32 [#allocation6], 4
      %s50 = int_to_ptr.vmem [resolvable:$true] %s49
      %55 = dma.hbm_to_vmem [thread:$0]  %s5, 2048, %s50, [#allocation5], 64, 64, 4
    $region25: #{decoder_forward.1} parent=1 // pred_fallthru
      _
    // Predicated region
    $region26: #{decoder_forward.1} parent=1 // pred_check
      _
    $region27: #{decoder_forward.1} parent=1 // pred_check_branch
      %57 = sbr.rel (0) target = $region29
    $region28: #{decoder_forward.1} parent=1 // pred_region
      _
    $region29: #{decoder_forward.1} parent=1 // pred_fallthru
      _
    // Predicated region
    $region30: #{decoder_forward.1} parent=1 // pred_check
      _
    $region31: #{decoder_forward.1} parent=1 // pred_check_branch
      %59 = sbr.rel (0) target = $region33
    $region32: #{decoder_forward.1} parent=1 // pred_region
      %60 = dma.done [#allocation3], 576
    $region33: #{decoder_forward.1} parent=1 // pred_fallthru
      _
    // Predicated region
    $region34: #{decoder_forward.1} parent=1 // pred_check
      _
    $region35: #{decoder_forward.1} parent=1 // pred_check_branch
      %62 = sbr.rel (0) target = $region37
    $region36: #{decoder_forward.1} parent=1 // pred_region
      %63 = dma.done [#allocation5], 2048
    $region37: #{decoder_forward.1} parent=1 // pred_fallthru
      _
    // Predicated region
    $region38: #{decoder_forward.1} parent=1 // pred_check
      _
    $region39: #{decoder_forward.1} parent=1 // pred_check_branch
      %65 = sbr.rel (0) target = $region41
    $region40: #{decoder_forward.1} parent=1 // pred_region
      %66 = dma.done [#allocation5], 2048
    $region41: #{decoder_forward.1} parent=1 // pred_fallthru
      _
    %v68 = vld [vmem:[%s0] sm:$0xff]
    %v69 = vpack.c.bf16 %v68, %v68
    %v70 = vld [vmem:[#allocation2] sm:$0xf]
    %v71 = vld [vmem:[#allocation2 + $0x4] sm:$0xf]
    %v72 = vld [vmem:[#allocation2 + $0x8] sm:$0xf]
    %v73 = vld [vmem:[#allocation2 + $0xc] sm:$0xf]
    %v74 = vld [vmem:[#allocation2 + $0x10] sm:$0xf]
    %v75 = vld [vmem:[#allocation2 + $0x14] sm:$0xf]
    %v76 = vld [vmem:[#allocation2 + $0x18] sm:$0xf]
    %v77 = vld [vmem:[#allocation2 + $0x1c] sm:$0xf]
    %v78 = vld [vmem:[#allocation2 + $0x20] sm:$0xf]
    %v79 = vld [vmem:[%s2] sm:$0x1]
    %v81 = vlaneseq
    %v82 = vshrl.u32 %v81, 7
    %v83 = vsub.s32 0, %v82
    %v84 = vrot.slane %v79, %v83
    %v95 = vunpack.c.l.b16 %v70
    %v96 = vunpack.c.l.b16 %v71
    %v97 = vunpack.c.l.b16 %v72
    %v98 = vunpack.c.l.b16 %v73
    %v99 = vunpack.c.l.b16 %v74
    %v100 = vunpack.c.l.b16 %v75
    %v101 = vunpack.c.l.b16 %v76
    %v102 = vunpack.c.l.b16 %v77
    %v103 = vunpack.c.l.b16 %v78
    %v104 = vpack.c.b16 %v96, %v95
    %v105 = vpack.c.b16 %v98, %v97
    %v106 = vpack.c.b16 %v100, %v99
    %v107 = vpack.c.b16 %v102, %v101
    %v108 = vpack.c.b16 %v103, %v103
    %vm113 = vcmask 588800
    %v115 = vsel %vm113, %v69, 0
    %vm117 = vcmask 1043456
    %v119 = vsel %vm117, %v108, 0
    %121 = vmatprep.subr.bf16.mxu0 0
    %122 = vmatpush1.bf16.msra.mxu0 %v104
    %123 = vmatprep.subr.bf16.mxu0 0
    %124 = vmatpush1.bf16.msra.mxu0 %v105
    %125 = vmatprep.subr.bf16.mxu0 0
    %126 = vmatpush1.bf16.msra.mxu0 %v106
    %127 = vmatprep.subr.bf16.mxu0 0
    %128 = vmatpush1.bf16.msra.mxu0 %v107
    %129 = vmatprep.subr.bf16.mxu0 0
    %130 = vmatpush1.bf16.msra.mxu0 %v119
    %131 = vmatprep.subr.bf16.mxu0 0
    %132 = vmatpush1.bf16.msra.mxu0 0
    %133 = vmatprep.subr.bf16.mxu0 0
    %134 = vmatpush1.bf16.msra.mxu0 0
    %135 = vmatprep.subr.bf16.mxu0 0
    %136 = vmatpush1.bf16.msra.mxu0 0
    %137 = vmatprep.subr.bf16.mxu0 0
    %138 = vmatpush1.bf16.msra.mxu0 0
    %139 = vmatprep.subr.bf16.mxu0 0
    %140 = vmatpush1.bf16.msra.mxu0 0
    %141 = vmatprep.subr.bf16.mxu0 0
    %142 = vmatpush1.bf16.msra.mxu0 0
    %143 = vmatprep.subr.bf16.mxu0 0
    %144 = vmatpush1.bf16.msra.mxu0 0
    %145 = vmatprep.subr.bf16.mxu0 0
    %146 = vmatpush1.bf16.msra.mxu0 0
    %147 = vmatprep.subr.bf16.mxu0 0
    %148 = vmatpush1.bf16.msra.mxu0 0
    %149 = vmatprep.subr.bf16.mxu0 0
    %150 = vmatpush1.bf16.msra.mxu0 0
    %151 = vmatprep.subr.bf16.mxu0 0
    %152 = vmatpush1.bf16.msra.mxu0 0
    %153 = vmatprep.mubr.bf16.mxu0 0
    %154 = vmatmul.mubr.bf16.gmra.mrb[0].mxu0 %v115
    %v155 = vpop.f32.mrb[0].mxu0
    %v156 = vadd.f32 %v84, %v155
    %v157 = vpop.f32.mrb[0].mxu0
    %v158 = vpop.f32.mrb[0].mxu0
    %v159 = vpop.f32.mrb[0].mxu0
    %160 = vdwg.mxu0
    %v161 = vmax.f32 %v156, 0.0
    %v162 = vpack.c.bf16 %v161, %v161
    %v163 = vld [vmem:[#allocation4] sm:$0xff]
    %v164 = vld [vmem:[#allocation4 + $0x8] sm:$0xff]
    %v165 = vld [vmem:[#allocation4 + $0x10] sm:$0xff]
    %v166 = vld [vmem:[#allocation4 + $0x18] sm:$0xff]
    %v167 = vld [vmem:[#allocation4 + $0x20] sm:$0xff]
    %v168 = vld [vmem:[#allocation4 + $0x28] sm:$0xff]
    %v169 = vld [vmem:[#allocation4 + $0x30] sm:$0xff]
    %v170 = vld [vmem:[#allocation4 + $0x38] sm:$0xff]
    %v171 = vld [vmem:[#allocation4 + $0x40] sm:$0xff]
    %v172 = vld [vmem:[#allocation4 + $0x48] sm:$0xff]
    %v173 = vld [vmem:[#allocation4 + $0x50] sm:$0xff]
    %v174 = vld [vmem:[#allocation4 + $0x58] sm:$0xff]
    %v175 = vld [vmem:[#allocation4 + $0x60] sm:$0xff]
    %v176 = vld [vmem:[#allocation4 + $0x68] sm:$0xff]
    %v177 = vld [vmem:[#allocation4 + $0x70] sm:$0xff]
    %v178 = vld [vmem:[#allocation4 + $0x78] sm:$0xff]
    %v179 = vld [vmem:[%s4] sm:$0x3]
    %v181 = vlaneseq
    %v182 = vshrl.u32 %v181, 7
    %v183 = vsub.s32 0, %v182
    %v184 = vrot.slane %v179, %v183
    %v185 = vlaneseq
    %v186 = vshrl.u32 %v185, 7
    %v187 = vsub.s32 1, %v186
    %v188 = vrot.slane %v179, %v187
    %v207 = vunpack.c.l.b16 %v163
    %v208 = vunpack.c.h.b16 %v163
    %v209 = vunpack.c.l.b16 %v164
    %v210 = vunpack.c.h.b16 %v164
    %v211 = vunpack.c.l.b16 %v165
    %v212 = vunpack.c.h.b16 %v165
    %v213 = vunpack.c.l.b16 %v166
    %v214 = vunpack.c.h.b16 %v166
    %v215 = vunpack.c.l.b16 %v167
    %v216 = vunpack.c.h.b16 %v167
    %v217 = vunpack.c.l.b16 %v168
    %v218 = vunpack.c.h.b16 %v168
    %v219 = vunpack.c.l.b16 %v169
    %v220 = vunpack.c.h.b16 %v169
    %v221 = vunpack.c.l.b16 %v170
    %v222 = vunpack.c.h.b16 %v170
    %v223 = vunpack.c.l.b16 %v171
    %v224 = vunpack.c.h.b16 %v171
    %v225 = vunpack.c.l.b16 %v172
    %v226 = vunpack.c.h.b16 %v172
    %v227 = vunpack.c.l.b16 %v173
    %v228 = vunpack.c.h.b16 %v173
    %v229 = vunpack.c.l.b16 %v174
    %v230 = vunpack.c.h.b16 %v174
    %v231 = vunpack.c.l.b16 %v175
    %v232 = vunpack.c.h.b16 %v175
    %v233 = vunpack.c.l.b16 %v176
    %v234 = vunpack.c.h.b16 %v176
    %v235 = vunpack.c.l.b16 %v177
    %v236 = vunpack.c.h.b16 %v177
    %v237 = vunpack.c.l.b16 %v178
    %v238 = vunpack.c.h.b16 %v178
    %v239 = vpack.c.b16 %v209, %v207
    %v240 = vpack.c.b16 %v210, %v208
    %v241 = vpack.c.b16 %v213, %v211
    %v242 = vpack.c.b16 %v214, %v212
    %v243 = vpack.c.b16 %v217, %v215
    %v244 = vpack.c.b16 %v218, %v216
    %v245 = vpack.c.b16 %v221, %v219
    %v246 = vpack.c.b16 %v222, %v220
    %v247 = vpack.c.b16 %v225, %v223
    %v248 = vpack.c.b16 %v226, %v224
    %v249 = vpack.c.b16 %v229, %v227
    %v250 = vpack.c.b16 %v230, %v228
    %v251 = vpack.c.b16 %v233, %v231
    %v252 = vpack.c.b16 %v234, %v232
    %v253 = vpack.c.b16 %v237, %v235
    %v254 = vpack.c.b16 %v238, %v236
    %271 = vmatprep.subr.bf16.mxu0 %v240
    %272 = vmatpush1.bf16.msra.mxu0 %v239
    %273 = vmatprep.subr.bf16.mxu0 %v242
    %274 = vmatpush1.bf16.msra.mxu0 %v241
    %275 = vmatprep.subr.bf16.mxu0 %v244
    %276 = vmatpush1.bf16.msra.mxu0 %v243
    %277 = vmatprep.subr.bf16.mxu0 %v246
    %278 = vmatpush1.bf16.msra.mxu0 %v245
    %279 = vmatprep.subr.bf16.mxu0 %v248
    %280 = vmatpush1.bf16.msra.mxu0 %v247
    %281 = vmatprep.subr.bf16.mxu0 %v250
    %282 = vmatpush1.bf16.msra.mxu0 %v249
    %283 = vmatprep.subr.bf16.mxu0 %v252
    %284 = vmatpush1.bf16.msra.mxu0 %v251
    %285 = vmatprep.subr.bf16.mxu0 %v254
    %286 = vmatpush1.bf16.msra.mxu0 %v253
    %287 = vmatprep.subr.bf16.mxu0 0
    %288 = vmatpush1.bf16.msra.mxu0 0
    %289 = vmatprep.subr.bf16.mxu0 0
    %290 = vmatpush1.bf16.msra.mxu0 0
    %291 = vmatprep.subr.bf16.mxu0 0
    %292 = vmatpush1.bf16.msra.mxu0 0
    %293 = vmatprep.subr.bf16.mxu0 0
    %294 = vmatpush1.bf16.msra.mxu0 0
    %295 = vmatprep.subr.bf16.mxu0 0
    %296 = vmatpush1.bf16.msra.mxu0 0
    %297 = vmatprep.subr.bf16.mxu0 0
    %298 = vmatpush1.bf16.msra.mxu0 0
    %299 = vmatprep.subr.bf16.mxu0 0
    %300 = vmatpush1.bf16.msra.mxu0 0
    %301 = vmatprep.subr.bf16.mxu0 0
    %302 = vmatpush1.bf16.msra.mxu0 0
    %303 = vmatprep.mubr.bf16.mxu0 0
    %304 = vmatmul.mubr.bf16.gmra.mrb[0].mxu0 %v162
    %v305 = vpop.f32.mrb[0].mxu0
    %v306 = vadd.f32 %v184, %v305
    %v307 = vpop.f32.mrb[0].mxu0
    %v308 = vadd.f32 %v188, %v307
    %v309 = vpop.f32.mrb[0].mxu0
    %v310 = vpop.f32.mrb[0].mxu0
    %311 = vdwg.mxu0
    %v312 = vmax.f32 %v306, 0.0
    %v313 = vmax.f32 %v308, 0.0
    %v314 = vpack.c.bf16 %v312, %v312
    %v315 = vpack.c.bf16 %v313, %v313
    %v316 = vld [vmem:[#allocation6] sm:$0xf]
    %v317 = vld [vmem:[#allocation6 + $0x4] sm:$0xf]
    %v318 = vld [vmem:[#allocation6 + $0x8] sm:$0xf]
    %v319 = vld [vmem:[#allocation6 + $0xc] sm:$0xf]
    %v320 = vld [vmem:[#allocation6 + $0x10] sm:$0xf]
    %v321 = vld [vmem:[#allocation6 + $0x14] sm:$0xf]
    %v322 = vld [vmem:[#allocation6 + $0x18] sm:$0xf]
    %v323 = vld [vmem:[#allocation6 + $0x1c] sm:$0xf]
    %v324 = vld [vmem:[#allocation6 + $0x20] sm:$0xf]
    %v325 = vld [vmem:[#allocation6 + $0x24] sm:$0xf]
    %v326 = vld [vmem:[#allocation6 + $0x28] sm:$0xf]
    %v327 = vld [vmem:[#allocation6 + $0x2c] sm:$0xf]
    %v328 = vld [vmem:[#allocation6 + $0x30] sm:$0xf]
    %v329 = vld [vmem:[#allocation6 + $0x34] sm:$0xf]
    %v330 = vld [vmem:[#allocation6 + $0x38] sm:$0xf]
    %v331 = vld [vmem:[#allocation6 + $0x3c] sm:$0xf]
    %v332 = vld [vmem:[#allocation6 + $0x40] sm:$0xf]
    %v333 = vld [vmem:[#allocation6 + $0x44] sm:$0xf]
    %v334 = vld [vmem:[#allocation6 + $0x48] sm:$0xf]
    %v335 = vld [vmem:[#allocation6 + $0x4c] sm:$0xf]
    %v336 = vld [vmem:[#allocation6 + $0x50] sm:$0xf]
    %v337 = vld [vmem:[#allocation6 + $0x54] sm:$0xf]
    %v338 = vld [vmem:[#allocation6 + $0x58] sm:$0xf]
    %v339 = vld [vmem:[#allocation6 + $0x5c] sm:$0xf]
    %v340 = vld [vmem:[#allocation6 + $0x60] sm:$0xf]
    %v341 = vld [vmem:[#allocation6 + $0x64] sm:$0xf]
    %v342 = vld [vmem:[#allocation6 + $0x68] sm:$0xf]
    %v343 = vld [vmem:[#allocation6 + $0x6c] sm:$0xf]
    %v344 = vld [vmem:[#allocation6 + $0x70] sm:$0xf]
    %v345 = vld [vmem:[#allocation6 + $0x74] sm:$0xf]
    %v346 = vld [vmem:[#allocation6 + $0x78] sm:$0xf]
    %v347 = vld [vmem:[#allocation6 + $0x7c] sm:$0xf]
    %v348 = vld [vmem:[%s6] sm:$0x1]
    %v350 = vlaneseq
    %v351 = vshrl.u32 %v350, 7
    %v352 = vsub.s32 0, %v351
    %v353 = vrot.slane %v348, %v352
    %v387 = vunpack.c.l.b16 %v316
    %v388 = vunpack.c.l.b16 %v317
    %v389 = vunpack.c.l.b16 %v318
    %v390 = vunpack.c.l.b16 %v319
    %v391 = vunpack.c.l.b16 %v320
    %v392 = vunpack.c.l.b16 %v321
    %v393 = vunpack.c.l.b16 %v322
    %v394 = vunpack.c.l.b16 %v323
    %v395 = vunpack.c.l.b16 %v324
    %v396 = vunpack.c.l.b16 %v325
    %v397 = vunpack.c.l.b16 %v326
    %v398 = vunpack.c.l.b16 %v327
    %v399 = vunpack.c.l.b16 %v328
    %v400 = vunpack.c.l.b16 %v329
    %v401 = vunpack.c.l.b16 %v330
    %v402 = vunpack.c.l.b16 %v331
    %v403 = vunpack.c.l.b16 %v332
    %v404 = vunpack.c.l.b16 %v333
    %v405 = vunpack.c.l.b16 %v334
    %v406 = vunpack.c.l.b16 %v335
    %v407 = vunpack.c.l.b16 %v336
    %v408 = vunpack.c.l.b16 %v337
    %v409 = vunpack.c.l.b16 %v338
    %v410 = vunpack.c.l.b16 %v339
    %v411 = vunpack.c.l.b16 %v340
    %v412 = vunpack.c.l.b16 %v341
    %v413 = vunpack.c.l.b16 %v342
    %v414 = vunpack.c.l.b16 %v343
    %v415 = vunpack.c.l.b16 %v344
    %v416 = vunpack.c.l.b16 %v345
    %v417 = vunpack.c.l.b16 %v346
    %v418 = vunpack.c.l.b16 %v347
    %v419 = vpack.c.b16 %v388, %v387
    %v420 = vpack.c.b16 %v390, %v389
    %v421 = vpack.c.b16 %v392, %v391
    %v422 = vpack.c.b16 %v394, %v393
    %v423 = vpack.c.b16 %v396, %v395
    %v424 = vpack.c.b16 %v398, %v397
    %v425 = vpack.c.b16 %v400, %v399
    %v426 = vpack.c.b16 %v402, %v401
    %v427 = vpack.c.b16 %v404, %v403
    %v428 = vpack.c.b16 %v406, %v405
    %v429 = vpack.c.b16 %v408, %v407
    %v430 = vpack.c.b16 %v410, %v409
    %v431 = vpack.c.b16 %v412, %v411
    %v432 = vpack.c.b16 %v414, %v413
    %v433 = vpack.c.b16 %v416, %v415
    %v434 = vpack.c.b16 %v418, %v417
    %451 = vmatprep.subr.bf16.mxu0 0
    %452 = vmatpush1.bf16.msra.mxu0 %v419
    %453 = vmatprep.subr.bf16.mxu0 0
    %454 = vmatpush1.bf16.msra.mxu0 %v420
    %455 = vmatprep.subr.bf16.mxu0 0
    %456 = vmatpush1.bf16.msra.mxu0 %v421
    %457 = vmatprep.subr.bf16.mxu0 0
    %458 = vmatpush1.bf16.msra.mxu0 %v422
    %459 = vmatprep.subr.bf16.mxu0 0
    %460 = vmatpush1.bf16.msra.mxu0 %v423
    %461 = vmatprep.subr.bf16.mxu0 0
    %462 = vmatpush1.bf16.msra.mxu0 %v424
    %463 = vmatprep.subr.bf16.mxu0 0
    %464 = vmatpush1.bf16.msra.mxu0 %v425
    %465 = vmatprep.subr.bf16.mxu0 0
    %466 = vmatpush1.bf16.msra.mxu0 %v426
    %467 = vmatprep.subr.bf16.mxu0 0
    %468 = vmatpush1.bf16.msra.mxu0 %v427
    %469 = vmatprep.subr.bf16.mxu0 0
    %470 = vmatpush1.bf16.msra.mxu0 %v428
    %471 = vmatprep.subr.bf16.mxu0 0
    %472 = vmatpush1.bf16.msra.mxu0 %v429
    %473 = vmatprep.subr.bf16.mxu0 0
    %474 = vmatpush1.bf16.msra.mxu0 %v430
    %475 = vmatprep.subr.bf16.mxu0 0
    %476 = vmatpush1.bf16.msra.mxu0 %v431
    %477 = vmatprep.subr.bf16.mxu0 0
    %478 = vmatpush1.bf16.msra.mxu0 %v432
    %479 = vmatprep.subr.bf16.mxu0 0
    %480 = vmatpush1.bf16.msra.mxu0 %v433
    %481 = vmatprep.subr.bf16.mxu0 0
    %482 = vmatpush1.bf16.msra.mxu0 %v434
    %483 = vmatprep.mubr.bf16.mxu0 %v315
    %484 = vmatmul.mubr.bf16.gmra.mrb[0].mxu0 %v314
    %v485 = vpop.f32.mrb[0].mxu0
    %v486 = vadd.f32 %v353, %v485
    %v487 = vpop.f32.mrb[0].mxu0
    %v488 = vpop.f32.mrb[0].mxu0
    %v489 = vpop.f32.mrb[0].mxu0
    %490 = vdwg.mxu0
    %v491 = vxor.u32 %v486, 2147483648
    %v492 = vmul.f32 %v491, 1.442695
    %v493 = vpow.pop %v492
    %v494 = vadd.f32 %v493, 1.0
    %v495 = vrcp.pop %v494
    %v496 = vmul.f32 1.0, %v495
    %497 = vst [vmem:[#allocation7] sm:$0xff] %v496
    // Predicated region
    $region42: #{decoder_forward.1} parent=1 // pred_check
      _
    $region43: #{decoder_forward.1} parent=1 // pred_check_branch
      %499 = sbr.rel (0) target = $region45
    $region44: #{decoder_forward.1} parent=1 // pred_region
      // Predicated region
      $region46: #{decoder_forward.1} parent=44 // pred_check
        _
      $region47: #{decoder_forward.1} parent=44 // pred_check_branch
        %501 = sbr.rel (0) target = $region49
      $region48: #{decoder_forward.1} parent=44 // pred_region
        // Predicated region
        $region50: #{decoder_forward.1} parent=48 // pred_check
          _
        $region51: #{decoder_forward.1} parent=48 // pred_check_branch
          %503 = sbr.rel target = $region53
        $region52: #{decoder_forward.1} parent=48 // pred_region
          // Predicated region
          $region65: #{decoder_forward.1} parent=52 // pred_check
            _
          $region66: #{decoder_forward.1} parent=52 // pred_check_branch
            %518 = sbr.rel (0) target = $region68
          $region67: #{decoder_forward.1} parent=52 // pred_region
            loop: start=0, step=1, limit=1
            $region69: #{decoder_forward.1} parent=67 // loop_pre_header
              _
            $region70: #{decoder_forward.1} parent=67 // loop_header
              %s521 = sphi 0, %s525
              %p522 = scmp.ge.s32.totalorder %s521, 1
              %s526 = sphi [#allocation7], [#allocation7]
              %s527 = sphi %s7, %s7
            $region71: #{decoder_forward.1} parent=67 // loop_header_branch
              %524 = sbr.rel (%p522) target = $region75
            $region72: #{decoder_forward.1} parent=67 // loop_body
              %v528 = vld [vmem:[%s526] sm:$0x1]
              %529 = vst [vmem:[%s527] sm:$0x1] %v528
            $region73: #{decoder_forward.1} parent=67 // loop_footer
              %s525 = sadd.s32 1, %s521
            $region74: #{decoder_forward.1} parent=67 // loop_footer_branch
              %520 = sbr.rel target = $region70
            $region75: #{decoder_forward.1} parent=67 // loop_exit
              _
          $region68: #{decoder_forward.1} parent=52 // pred_fallthru
            _
        $region53: #{decoder_forward.1} parent=48 // pred_fallthru
          _
        // Predicated region
        $region54: #{decoder_forward.1} parent=48 // pred_check
          _
        $region55: #{decoder_forward.1} parent=48 // pred_check_branch
          %505 = sbr.rel (0) target = $region57
        $region56: #{decoder_forward.1} parent=48 // pred_region
          loop: start=0, step=1, limit=1
          $region58: #{decoder_forward.1} parent=56 // loop_pre_header
            _
          $region59: #{decoder_forward.1} parent=56 // loop_header
            %s508 = sphi 0, %s512
            %p509 = scmp.ge.s32.totalorder %s508, 1
            %s513 = sphi [#allocation7], [#allocation7]
            %s514 = sphi %s7, %s7
          $region60: #{decoder_forward.1} parent=56 // loop_header_branch
            %511 = sbr.rel (%p509) target = $region64
          $region61: #{decoder_forward.1} parent=56 // loop_body
            %v515 = vld [vmem:[%s513] sm:$0x1]
            %516 = vst [vmem:[%s514] sm:$0x1] %v515
          $region62: #{decoder_forward.1} parent=56 // loop_footer
            %s512 = sadd.s32 1, %s508
          $region63: #{decoder_forward.1} parent=56 // loop_footer_branch
            %507 = sbr.rel target = $region59
          $region64: #{decoder_forward.1} parent=56 // loop_exit
            _
        $region57: #{decoder_forward.1} parent=48 // pred_fallthru
          _
      $region49: #{decoder_forward.1} parent=44 // pred_fallthru
        _
      %530 = vnop
    $region45: #{decoder_forward.1} parent=1 // pred_fallthru
      _
    // Predicated region
    $region76: #{decoder_forward.1} parent=1 // pred_check
      _
    $region77: #{decoder_forward.1} parent=1 // pred_check_branch
      %532 = sbr.rel (0) target = $region79
    $region78: #{decoder_forward.1} parent=1 // pred_region
      _
    $region79: #{decoder_forward.1} parent=1 // pred_fallthru
      _
    %533 = vsyncpa [#allocation3], 1
    %534 = vsyncpa [#allocation5], 1

</llo_original>
